<compile_context>
chip_gen: v5e
topology: v5e:2x2
jax: 0.10.0
libtpu: 0.0.40
codegen_flags: <defaults>
</compile_context>

<pallas_src>
import numpy as np
import jax
import jax.numpy as jnp
from jax.experimental import pallas as pl
from jax.experimental.pallas import tpu as pltpu

H_IN, W_IN = 3, 3
H_OUT, W_OUT = 7, 7
TILE_N_MAX = 8192  # rows per tile (multiple of 8); ~3.7 MiB double-buffered


# --------------------------------------------------------------------------
# Constant index tables / 0-1 gather-scatter matrices (trace-time numpy).
# --------------------------------------------------------------------------
def _build_index_tables():
    base = np.array([[1, 1], [3, 1], [5, 1], [2, 3], [4, 3], [3, 5]], dtype=np.int64)
    mapto = np.stack([base[:, 0] // 2, base[:, 1] // 2], axis=1)
    mapto[:, 0] -= mapto[:, 1] % 2
    evencc = np.array(
        [[1, 0], [2, 0], [3, 0], [4, 0], [5, 0], [6, 0],
         [1, 2], [2, 2], [3, 2], [4, 2], [5, 2], [6, 2],
         [2, 4], [3, 4], [4, 4], [5, 4], [3, 6], [4, 6]], dtype=np.int64)
    evencc_avg = np.array(
        [[[i - 1, max(j - 1, 0)], [i - 1, min(j + 1, W_OUT - 1)],
          [i, max(j - 1, 0)], [i, min(j + 1, W_OUT - 1)]]
         for i, j in evencc], dtype=np.int64)
    unevencc = np.array(
        [[0, 1], [2, 1], [4, 1], [6, 1], [1, 3], [3, 3], [5, 3], [2, 5], [4, 5]],
        dtype=np.int64)
    half = unevencc // 2
    return base, mapto, evencc, evencc_avg, unevencc, half


def _build_matrices():
    base, mapto, evencc, evencc_avg, unevencc, half = _build_index_tables()
    n_in, n_out = H_IN * W_IN, H_OUT * W_OUT

    m_base = np.zeros((n_in, n_out), np.float32)            # scatter base vertices
    for k in range(len(base)):
        m_base[mapto[k, 0] * W_IN + mapto[k, 1], base[k, 0] * W_OUT + base[k, 1]] += 1.0

    m_even_gather = np.zeros((n_out, len(evencc)), np.float32)   # 4-neighbor sum
    for v in range(len(evencc)):
        for k in range(4):
            r, c = evencc_avg[v, k]
            m_even_gather[r * W_OUT + c, v] += 1.0

    m_even_scatter = np.zeros((len(evencc), n_out), np.float32)
    for v in range(len(evencc)):
        m_even_scatter[v, evencc[v, 0] * W_OUT + evencc[v, 1]] += 1.0

    m_un_gather = np.zeros((n_in, len(unevencc)), np.float32)    # 2-neighbor sum
    for v in range(len(unevencc)):
        c = half[v, 1]
        r1 = min(int(half[v, 0]), H_IN - 1)
        r2 = max(int(half[v, 0]) - 1, 0)
        m_un_gather[r1 * W_IN + c, v] += 1.0
        m_un_gather[r2 * W_IN + c, v] += 1.0

    m_un_scatter = np.zeros((len(unevencc), n_out), np.float32)
    for v in range(len(unevencc)):
        m_un_scatter[v, unevencc[v, 0] * W_OUT + unevencc[v, 1]] += 1.0

    return m_base, m_even_gather, m_even_scatter, m_un_gather, m_un_scatter


# --------------------------------------------------------------------------
# Pallas kernel: one MXU pass per tile, (TILE_N, 9) @ (9, 49) -> (TILE_N, 49).
# --------------------------------------------------------------------------
def _depool_kernel(x_ref, m_ref, o_ref):
    o_ref[...] = jnp.dot(x_ref[...], m_ref[...],
                         preferred_element_type=jnp.float32)


def _round_up(n, m):
    return ((n + m - 1) // m) * m


def _fused_matrix(x0_flat):
    """Fold scatter + neighbor-averages + divides into one (9, 49) f32 matrix.

    The data-dependent non-zero counts come from the GLOBAL batch0/channel0
    row (x0_flat), matching the PyTorch semantics.  All matmuls here are tiny
    and kept in exact f32 (HIGHEST precision) so zero-detection / 1-3 counts
    stay exact.
    """
    mb, meg, mes, mug, mus = (jnp.asarray(m) for m in _build_matrices())
    hi = jax.lax.Precision.HIGHEST

    x0 = x0_flat.reshape(1, H_IN * W_IN).astype(jnp.float32)
    out1_0 = jnp.dot(x0, mb, precision=hi)                                   # (1, 49)
    even_cnt = jnp.dot((out1_0 != 0.0).astype(jnp.float32), meg, precision=hi)  # (1, 18)
    un_cnt = jnp.dot((x0 != 0.0).astype(jnp.float32), mug, precision=hi)         # (1, 9)
    inv_even = 1.0 / jnp.maximum(even_cnt, 1.0)
    inv_un = 1.0 / jnp.maximum(un_cnt, 1.0)

    m_even = jnp.dot(jnp.dot(mb, meg, precision=hi) * inv_even, mes, precision=hi)
    m_un = jnp.dot(mug * inv_un, mus, precision=hi)
    return mb + m_even + m_un                                                # (9, 49)


def first_depooling(x):
    """x: (B, C, 3, 3) float (NCHW)  ->  (B, C, 7, 7) float32."""
    B, C, Hi, Wi = x.shape
    assert (Hi, Wi) == (H_IN, W_IN)
    N = B * C
    xf = x.reshape(N, H_IN * W_IN).astype(jnp.float32)

    # Data-dependent denominators from the GLOBAL row 0 (batch0 / channel0).
    m_total = _fused_matrix(xf[0])

    # Tile N: multiple of 8 sublanes, balanced so padding stays tiny.
    n8 = _round_up(N, 8)
    num_tiles = max(1, pl.cdiv(n8, TILE_N_MAX))
    tile_n = _round_up(pl.cdiv(n8, num_tiles), 8)
    n_pad = num_tiles * tile_n
    if n_pad != N:
        xf = jnp.pad(xf, ((0, n_pad - N), (0, 0)))

    out = pl.pallas_call(
        _depool_kernel,
        out_shape=jax.ShapeDtypeStruct((n_pad, H_OUT * W_OUT), jnp.float32),
        grid=(num_tiles,),
        in_specs=[
            pl.BlockSpec((tile_n, H_IN * W_IN), lambda i: (i, 0)),
            pl.BlockSpec((H_IN * W_IN, H_OUT * W_OUT), lambda i: (0, 0)),  # resident
        ],
        out_specs=pl.BlockSpec((tile_n, H_OUT * W_OUT), lambda i: (i, 0)),
        compiler_params=pltpu.CompilerParams(
            dimension_semantics=("parallel",),
        ),
    )(xf, m_total)

    return out[:N].reshape(B, C, H_OUT, W_OUT)


# --------------------------------------------------------------------------
# Numpy reference (direct transcription of the PyTorch forward).
# --------------------------------------------------------------------------
def _reference_numpy(x):
    base, mapto, evencc, evencc_avg, unevencc, half = _build_index_tables()
    B, C = x.shape[0], x.shape[1]
    out = np.zeros((B, C, H_OUT, W_OUT), dtype=np.float32)
    out[:, :, base[:, 0], base[:, 1]] = x[:, :, mapto[:, 0], mapto[:, 1]]

    g = np.stack([out[:, :, evencc_avg[:, k, 0], evencc_avg[:, k, 1]] for k in range(4)], 0)
    s = g.sum(axis=0)
    cnt = (g[:, 0, 0] != 0).sum(axis=0)
    out[:, :, evencc[:, 0], evencc[:, 1]] = s / np.maximum(cnt, 1)

    r1 = np.minimum(half[:, 0], H_IN - 1)
    r2 = np.maximum(half[:, 0] - 1, 0)
    c = half[:, 1]
    g = np.stack([x[:, :, r1, c], x[:, :, r2, c]], 0)
    s = g.sum(axis=0)
    cnt = (g[:, 0, 0] != 0).sum(axis=0)
    out[:, :, unevencc[:, 0], unevencc[:, 1]] = s / np.maximum(cnt, 1)
    return out


if __name__ == "__main__":
    key = jax.random.PRNGKey(0)
    x = jax.random.normal(key, (2, 4, H_IN, W_IN), dtype=jnp.float32)

    fn = jax.jit(first_depooling)

    y = jax.block_until_ready(fn(x))
    np.testing.assert_allclose(np.asarray(y), _reference_numpy(np.asarray(x)),
                               rtol=1e-5, atol=1e-5)

    # Second check: inject zeros into batch0/channel0 so the data-dependent
    # non-zero-neighbor counts actually change.
    x2 = x.at[0, 0, 0, 0].set(0.0).at[0, 0, 1, 1].set(0.0)
    y2 = jax.block_until_ready(fn(x2))
    np.testing.assert_allclose(np.asarray(y2), _reference_numpy(np.asarray(x2)),
                               rtol=1e-5, atol=1e-5)

    print("KERNEL_OK")
</pallas_src>

<mosaic_0001>
module attributes {stable_mosaic.version = 11 : i64} {
  func.func @_depool_kernel(%arg0: i32, %arg1: memref<8x9xf32, #tpu.memory_space<vmem>>, %arg2: memref<9x49xf32, #tpu.memory_space<vmem>>, %arg3: memref<8x49xf32, #tpu.memory_space<vmem>>) attributes {dimension_semantics = [#tpu.dimension_semantics<parallel>], iteration_bounds = array<i64: 1>, scalar_prefetch = 0 : i64, scratch_operands = 0 : i64, tpu.core_type = #tpu.core_type<tc>, window_params = [{transform_indices = @transform_0, window_bounds = array<i64: 8, 9>}, {pipeline_mode = #tpu.pipeline_mode<synchronous>, transform_indices = @transform_1, window_bounds = array<i64: 9, 49>}, {transform_indices = @transform_2, window_bounds = array<i64: 8, 49>}]} {
    %c0 = arith.constant 0 : index
    %c0_0 = arith.constant 0 : index
    %0 = vector.load %arg1[%c0, %c0_0] : memref<8x9xf32, #tpu.memory_space<vmem>>, vector<8x9xf32>
    %c0_1 = arith.constant 0 : index
    %c0_2 = arith.constant 0 : index
    %1 = vector.load %arg2[%c0_1, %c0_2] : memref<9x49xf32, #tpu.memory_space<vmem>>, vector<9x49xf32>
    %cst = arith.constant dense<0.000000e+00> : vector<8x49xf32>
    %2 = tpu.matmul %0, %1, %cst {dimension_numbers = #tpu.dot_dimension_numbers<[1], [0], [0], [1], [0, 0, 1, 1], [], []>} : vector<8x9xf32>, vector<9x49xf32>, vector<8x49xf32> -> vector<8x49xf32>
    %c0_3 = arith.constant 0 : index
    %c0_4 = arith.constant 0 : index
    %3 = vector.load %arg3[%c0_3, %c0_4] : memref<8x49xf32, #tpu.memory_space<vmem>>, vector<8x49xf32>
    tpu.vector_store %arg3[%c0_3, %c0_4], %2 {strides = array<i32>} : memref<8x49xf32, #tpu.memory_space<vmem>>, vector<8x49xf32>,
    return
  }
  func.func @transform_0(%arg0: i32) -> (i32, i32) {
    %c0_i32 = arith.constant 0 : i32
    %c0_i32_0 = arith.constant 0 : i32
    return %arg0, %c0_i32 : i32, i32
  }
  func.func @transform_1(%arg0: i32) -> (i32, i32) {
    %c0_i32 = arith.constant 0 : i32
    %c0_i32_0 = arith.constant 0 : i32
    %c0_i32_1 = arith.constant 0 : i32
    return %c0_i32, %c0_i32_0 : i32, i32
  }
  func.func @transform_2(%arg0: i32) -> (i32, i32) {
    %c0_i32 = arith.constant 0 : i32
    %c0_i32_0 = arith.constant 0 : i32
    return %arg0, %c0_i32 : i32, i32
  }
}

</mosaic_0001>

<llo_original>
// kernel: first_depooling.1
$region0: #{first_depooling.1}
  #allocation0 [shape = 'u32[]', space=smem, size = 0x4, offset = 0x4, fixed_abs, tag = 'smem constant byte address 0x4 - core index']
  #allocation1 [shape = 'u32[72,128]{1,0:T(1,128)}', space=vmem, size = 0x9000, scoped, tag = 'internal scratch']
  %s0 = inlined_call_operand.vmem [shape: f32[8,9], index: 0, kind: input, shape index: {}]
  %s1 = inlined_call_operand.vmem [shape: f32[9,49], index: 1, kind: input, shape index: {}]
  %s2 = inlined_call_operand.vmem [shape: f32[8,49], index: 2, kind: output, shape index: {}]
  %s3 = sld [smem:[#allocation0]]
  $region18: #{first_depooling.1} parent=0
    _
  %s5 = ssub.s32 1, %s3
  %s6 = scalar_select 0, %s5, %s3
  // Predicated region
  $region2: #{first_depooling.1} parent=0 // pred_check
    _
  $region3: #{first_depooling.1} parent=0 // pred_check_branch
    %8 = sbr.rel (0) target = $region5
  $region4: #{first_depooling.1} parent=0 // pred_region
    _
  $region5: #{first_depooling.1} parent=0 // pred_fallthru
    _
  // Predicated region
  $region6: #{first_depooling.1} parent=0 // pred_check
    _
  $region7: #{first_depooling.1} parent=0 // pred_check_branch
    %10 = sbr.rel (0) target = $region9
  $region8: #{first_depooling.1} parent=0 // pred_region
    _
  $region9: #{first_depooling.1} parent=0 // pred_fallthru
    _
  %v11 = vld [vmem:[%s0] sm:$0xff]
  %v12 = vld [vmem:[%s1] sm:$0xff]
  %v13 = vld [vmem:[%s1 + $0x8] sm:$0x1]
  %vm14 = vcmask 72704
  %v16 = vsel %vm14, %v11, 0
  %vm18 = vcmask 1040384
  %v20 = vsel %vm18, %v13, 0
  %22 = vmatpush.msra.mxu0 0.0
  %23 = vmatpush.msra.mxu0 0.0
  %24 = vmatpush.msra.mxu0 0.0
  %25 = vmatpush.msra.mxu0 0.0
  %26 = vmatpush.msra.mxu0 0.0
  %27 = vmatpush.msra.mxu0 0.0
  %28 = vmatpush.msra.mxu0 0.0
  %29 = vmatpush.msra.mxu0 0.0
  %30 = vmatpush.msra.mxu0 0.0
  %31 = vmatpush.msra.mxu0 0.0
  %32 = vmatpush.msra.mxu0 0.0
  %33 = vmatpush.msra.mxu0 0.0
  %34 = vmatpush.msra.mxu0 0.0
  %35 = vmatpush.msra.mxu0 0.0
  %36 = vmatpush.msra.mxu0 %v20
  %37 = vmatpush.msra.mxu0 %v12
  %38 = vmatmul.f32.gmra.mxu0 %v16
  %v39 = vpop.f32.mrf.mxu0
  %v40 = vadd.f32 0.0, %v39
  %41 = vdwg.mxu0
  %vm42 = vcmask 400384
  %43 = vst.msk [vmem:[%s2] sm:$0xff] %vm42, %v40
  // Predicated region
  $region10: #{first_depooling.1} parent=0 // pred_check
    _
  $region11: #{first_depooling.1} parent=0 // pred_check_branch
    %45 = sbr.rel (0) target = $region13
  $region12: #{first_depooling.1} parent=0 // pred_region
    _
  $region13: #{first_depooling.1} parent=0 // pred_fallthru
    _
  // Predicated region
  $region14: #{first_depooling.1} parent=0 // pred_check
    _
  $region15: #{first_depooling.1} parent=0 // pred_check_branch
    %47 = sbr.rel (0) target = $region17
  $region16: #{first_depooling.1} parent=0 // pred_region
    _
  $region17: #{first_depooling.1} parent=0 // pred_fallthru
    _

</llo_original>
